<compile_context>
chip_gen: v6e
topology: v6e:2x2x1
jax: 0.10.0
libtpu: 0.0.40
codegen_flags: <defaults>
</compile_context>

<pallas_src>
import math

import jax
import jax.numpy as jnp
from jax.experimental import pallas as pl
from jax.experimental.pallas import tpu as pltpu

LANE = 128      # lane width
SUBLANE = 8     # f32 sublane height


def _round_up(x, m):
    return ((x + m - 1) // m) * m


def _padded_vmem_bytes(shape, dtype):
    """Bytes one buffer of `shape` actually occupies in VMEM (tiled layout)."""
    itemsize = jnp.dtype(dtype).itemsize
    if len(shape) == 0:
        rows, cols = 1, 1
    elif len(shape) == 1:
        rows, cols = 1, int(shape[0])
    else:
        rows, cols = int(math.prod(shape[:-1])), int(shape[-1])
    sub = max(1, 32 // itemsize)            # 8 for f32, 16 for bf16, 32 for i8
    return _round_up(rows, sub) * _round_up(cols, LANE) * itemsize


def adversary_kernel(x_ref,
                     w1_ref, b1_ref,
                     w2_ref, b2_ref,
                     w3_ref, b3_ref,
                     w4_ref, b4_ref,
                     o_ref):
    x = x_ref[...]                                    # [TB, 1] f32

    # Layer 1: Linear(1 -> H) is an outer product -> keep it on the VPU
    # (avoids a degenerate K=1 MXU push/pop round trip).
    h = x * w1_ref[...] + b1_ref[...]                 # (TB,1)*(1,H) -> (TB,H)
    h = jnp.maximum(h, 0.0)

    # Layers 2-4: bf16 MXU operands, f32 accumulation; elementwise stays f32.
    h = jnp.dot(h.astype(jnp.bfloat16), w2_ref[...],
                preferred_element_type=jnp.float32) + b2_ref[...]
    h = jnp.maximum(h, 0.0)

    h = jnp.dot(h.astype(jnp.bfloat16), w3_ref[...],
                preferred_element_type=jnp.float32) + b3_ref[...]
    h = jnp.maximum(h, 0.0)

    logits = jnp.dot(h.astype(jnp.bfloat16), w4_ref[...],
                     preferred_element_type=jnp.float32) + b4_ref[...]

    # Clamp so exp(-logits) cannot overflow to +inf (approx recip at inf is
    # hardware-path dependent).  exp(30) ~ 1e13, well inside f32 range.
    logits = jnp.clip(logits, -30.0, 30.0)

    # sigmoid: exp + approximate reciprocal both use the otherwise-idle EUP slot.
    o_ref[...] = pl.reciprocal(1.0 + jnp.exp(-logits), approx=True).astype(o_ref.dtype)


def adversary_forward(x, params, *, tb=4096):
    """x: [B, 1] float32.  params: dict of f32 weights/biases stored as [in, out].
    Returns [B, n_sensitive] float32."""
    H = params["w2"].shape[0]
    n_sensitive = params["w4"].shape[1]

    # ---- Weight preparation (once, in the wrapper) -------------------------
    w1 = params["w1"].astype(jnp.float32)             # (1, H)  VPU layer stays f32
    b1 = params["b1"].astype(jnp.float32)             # (1, H)
    w2 = params["w2"].astype(jnp.bfloat16)            # (H, H)  MXU operand
    b2 = params["b2"].astype(jnp.float32)
    w3 = params["w3"].astype(jnp.bfloat16)
    b3 = params["b3"].astype(jnp.float32)

    # Narrow output: pad only to a sublane multiple (8), not 128 lanes.  The
    # output block's last dim equals the full array's last dim, which still
    # satisfies the (8,128) BlockSpec rule while cutting HBM writeback ~16x.
    out_pad = _round_up(n_sensitive, SUBLANE)
    w4 = (jnp.zeros((H, out_pad), jnp.float32)
          .at[:, :n_sensitive].set(params["w4"].astype(jnp.float32))
          .astype(jnp.bfloat16))
    b4 = (jnp.zeros((1, out_pad), jnp.float32)
          .at[:, :n_sensitive].set(params["b4"].astype(jnp.float32)))

    # ---- Batch tiling -------------------------------------------------------
    B = x.shape[0]
    B8 = _round_up(B, SUBLANE)
    tb = max(SUBLANE, min(int(tb), 8192))             # cap TB: (TB,1) x-tile is TB*512 B in VMEM
    if B8 <= tb:
        n_steps = 1
        TB = B8
    else:
        # Even step count so ("parallel",) splits cleanly over v7x's 2 TCs.
        n_steps = _round_up(-(-B8 // tb), 2)
        TB = _round_up(-(-B8 // n_steps), SUBLANE)
    B_pad = TB * n_steps

    x_pad = x.astype(jnp.float32)
    if B_pad != B:
        x_pad = jnp.pad(x_pad, ((0, B_pad - B), (0, 0)))
    grid = (n_steps,)

    # ---- VMEM budget (lane/sublane-padded sizes, double-buffered) ----------
    weights_vmem = sum(_padded_vmem_bytes(a.shape, a.dtype)
                       for a in (w1, b1, w2, b2, w3, b3, w4, b4))
    x_tile_vmem = _padded_vmem_bytes((TB, 1), jnp.float32)        # TB*512 B
    out_tile_vmem = _padded_vmem_bytes((TB, out_pad), jnp.float32)
    footprint = 2 * (weights_vmem + x_tile_vmem + out_tile_vmem)  # double-buffered
    vmem_limit = int(min(48 * 1024 * 1024,                        # headroom on v7x (64 MiB)
                         max(4 * 1024 * 1024, 2 * footprint)))

    weights_hbm = sum(int(a.size) * a.dtype.itemsize
                      for a in (w1, b1, w2, b2, w3, b3, w4, b4))
    cost = pl.CostEstimate(
        flops=int(2 * B_pad * (H + 2 * H * H + H * out_pad)),
        transcendentals=int(B_pad * out_pad),
        bytes_accessed=int(B_pad * 1 * 4 + weights_hbm + B_pad * out_pad * 4),
    )

    # Weights/biases: whole-array blocks with constant index_map -> stay
    # VMEM-resident across grid steps (no re-DMA).
    def const(a):
        nd = a.ndim
        return pl.BlockSpec(a.shape, lambda i, _nd=nd: (0,) * _nd)

    out = pl.pallas_call(
        adversary_kernel,
        out_shape=jax.ShapeDtypeStruct((B_pad, out_pad), jnp.float32),
        grid=grid,
        in_specs=[pl.BlockSpec((TB, 1), lambda i: (i, 0)),
                  const(w1), const(b1),
                  const(w2), const(b2),
                  const(w3), const(b3),
                  const(w4), const(b4)],
        out_specs=pl.BlockSpec((TB, out_pad), lambda i: (i, 0)),
        compiler_params=pltpu.CompilerParams(
            dimension_semantics=("parallel",),
            vmem_limit_bytes=vmem_limit),
        cost_estimate=cost,
    )(x_pad, w1, b1, w2, b2, w3, b3, w4, b4)

    return out[:B, :n_sensitive]


def init_params(key, n_sensitive, n_hidden=32):
    """Deterministic synthetic init (PyTorch-like uniform(-1/sqrt(fan_in), 1/sqrt(fan_in)))."""
    ks = jax.random.split(key, 8)

    def uniform(k, shape, fan_in):
        bound = 1.0 / jnp.sqrt(jnp.float32(fan_in))
        return jax.random.uniform(k, shape, jnp.float32, -bound, bound)

    return {
        "w1": uniform(ks[0], (1, n_hidden), 1),
        "b1": uniform(ks[1], (1, n_hidden), 1),
        "w2": uniform(ks[2], (n_hidden, n_hidden), n_hidden),
        "b2": uniform(ks[3], (1, n_hidden), n_hidden),
        "w3": uniform(ks[4], (n_hidden, n_hidden), n_hidden),
        "b3": uniform(ks[5], (1, n_hidden), n_hidden),
        "w4": uniform(ks[6], (n_hidden, n_sensitive), n_hidden),
        "b4": uniform(ks[7], (1, n_sensitive), n_hidden),
    }


def reference_forward(x, p):
    """Pure-f32 JAX reference matching the PyTorch module semantics."""
    h = jnp.maximum(x @ p["w1"] + p["b1"], 0.0)
    h = jnp.maximum(h @ p["w2"] + p["b2"], 0.0)
    h = jnp.maximum(h @ p["w3"] + p["b3"], 0.0)
    return jax.nn.sigmoid(h @ p["w4"] + p["b4"])


if __name__ == "__main__":
    key = jax.random.PRNGKey(0)
    k_param, k_x = jax.random.split(key)

    batch = 8
    n_hidden = 32
    n_sensitive = 2  # Z.shape[1] in the original script

    params = init_params(k_param, n_sensitive, n_hidden)
    x = jax.random.normal(k_x, (batch, 1), jnp.float32)

    out = adversary_forward(x, params)
    out = jax.block_until_ready(out)

    ref = reference_forward(x, params)
    assert out.shape == (batch, n_sensitive)
    # Loose tolerance: kernel uses bf16 MXU operands + approx reciprocal; the
    # reference is pure f32. Sigmoid outputs in [0,1] so 5e-2 abs is ample.
    assert jnp.allclose(out, ref, atol=5e-2, rtol=0.0), "mismatch vs pure-JAX reference"

    print("KERNEL_OK")
</pallas_src>

<mosaic_0001>
module attributes {stable_mosaic.version = 11 : i64} {
  func.func @adversary_kernel(%arg0: i32, %arg1: memref<8x1xf32, #tpu.memory_space<vmem>>, %arg2: memref<1x32xf32, #tpu.memory_space<vmem>>, %arg3: memref<1x32xf32, #tpu.memory_space<vmem>>, %arg4: memref<32x32xbf16, #tpu.memory_space<vmem>>, %arg5: memref<1x32xf32, #tpu.memory_space<vmem>>, %arg6: memref<32x32xbf16, #tpu.memory_space<vmem>>, %arg7: memref<1x32xf32, #tpu.memory_space<vmem>>, %arg8: memref<32x8xbf16, #tpu.memory_space<vmem>>, %arg9: memref<1x8xf32, #tpu.memory_space<vmem>>, %arg10: memref<8x8xf32, #tpu.memory_space<vmem>>) attributes {dimension_semantics = [#tpu.dimension_semantics<parallel>], iteration_bounds = array<i64: 1>, scalar_prefetch = 0 : i64, scratch_operands = 0 : i64, tpu.core_type = #tpu.core_type<tc>, window_params = [{transform_indices = @transform_0, window_bounds = array<i64: 8, 1>}, {pipeline_mode = #tpu.pipeline_mode<synchronous>, transform_indices = @transform_1, window_bounds = array<i64: 1, 32>}, {pipeline_mode = #tpu.pipeline_mode<synchronous>, transform_indices = @transform_2, window_bounds = array<i64: 1, 32>}, {pipeline_mode = #tpu.pipeline_mode<synchronous>, transform_indices = @transform_3, window_bounds = array<i64: 32, 32>}, {pipeline_mode = #tpu.pipeline_mode<synchronous>, transform_indices = @transform_4, window_bounds = array<i64: 1, 32>}, {pipeline_mode = #tpu.pipeline_mode<synchronous>, transform_indices = @transform_5, window_bounds = array<i64: 32, 32>}, {pipeline_mode = #tpu.pipeline_mode<synchronous>, transform_indices = @transform_6, window_bounds = array<i64: 1, 32>}, {pipeline_mode = #tpu.pipeline_mode<synchronous>, transform_indices = @transform_7, window_bounds = array<i64: 32, 8>}, {pipeline_mode = #tpu.pipeline_mode<synchronous>, transform_indices = @transform_8, window_bounds = array<i64: 1, 8>}, {transform_indices = @transform_9, window_bounds = array<i64: 8, 8>}]} {
    %c0 = arith.constant 0 : index
    %c0_0 = arith.constant 0 : index
    %0 = vector.load %arg1[%c0, %c0_0] : memref<8x1xf32, #tpu.memory_space<vmem>>, vector<8x1xf32>
    %c0_1 = arith.constant 0 : index
    %c0_2 = arith.constant 0 : index
    %1 = vector.load %arg2[%c0_1, %c0_2] : memref<1x32xf32, #tpu.memory_space<vmem>>, vector<1x32xf32>
    %2 = vector.broadcast %0 : vector<8x1xf32> to vector<8x32xf32>
    %3 = vector.broadcast %1 : vector<1x32xf32> to vector<8x32xf32>
    %4 = arith.mulf %2, %3 : vector<8x32xf32>
    %c0_3 = arith.constant 0 : index
    %c0_4 = arith.constant 0 : index
    %5 = vector.load %arg3[%c0_3, %c0_4] : memref<1x32xf32, #tpu.memory_space<vmem>>, vector<1x32xf32>
    %6 = vector.broadcast %5 : vector<1x32xf32> to vector<8x32xf32>
    %7 = arith.addf %4, %6 : vector<8x32xf32>
    %cst = arith.constant 0.000000e+00 : f32
    %8 = vector.broadcast %cst : f32 to vector<8x32xf32>
    %9 = arith.maximumf %7, %8 : vector<8x32xf32>
    %10 = arith.truncf %9 : vector<8x32xf32> to vector<8x32xbf16>
    %c0_5 = arith.constant 0 : index
    %c0_6 = arith.constant 0 : index
    %11 = vector.load %arg4[%c0_5, %c0_6] : memref<32x32xbf16, #tpu.memory_space<vmem>>, vector<32x32xbf16>
    %cst_7 = arith.constant dense<0.000000e+00> : vector<8x32xf32>
    %12 = tpu.matmul %10, %11, %cst_7 {dimension_numbers = #tpu.dot_dimension_numbers<[1], [0], [0], [1], [0, 0, 1, 1], [], []>} : vector<8x32xbf16>, vector<32x32xbf16>, vector<8x32xf32> -> vector<8x32xf32>
    %c0_8 = arith.constant 0 : index
    %c0_9 = arith.constant 0 : index
    %13 = vector.load %arg5[%c0_8, %c0_9] : memref<1x32xf32, #tpu.memory_space<vmem>>, vector<1x32xf32>
    %14 = vector.broadcast %13 : vector<1x32xf32> to vector<8x32xf32>
    %15 = arith.addf %12, %14 : vector<8x32xf32>
    %cst_10 = arith.constant 0.000000e+00 : f32
    %16 = vector.broadcast %cst_10 : f32 to vector<8x32xf32>
    %17 = arith.maximumf %15, %16 : vector<8x32xf32>
    %18 = arith.truncf %17 : vector<8x32xf32> to vector<8x32xbf16>
    %c0_11 = arith.constant 0 : index
    %c0_12 = arith.constant 0 : index
    %19 = vector.load %arg6[%c0_11, %c0_12] : memref<32x32xbf16, #tpu.memory_space<vmem>>, vector<32x32xbf16>
    %cst_13 = arith.constant dense<0.000000e+00> : vector<8x32xf32>
    %20 = tpu.matmul %18, %19, %cst_13 {dimension_numbers = #tpu.dot_dimension_numbers<[1], [0], [0], [1], [0, 0, 1, 1], [], []>} : vector<8x32xbf16>, vector<32x32xbf16>, vector<8x32xf32> -> vector<8x32xf32>
    %c0_14 = arith.constant 0 : index
    %c0_15 = arith.constant 0 : index
    %21 = vector.load %arg7[%c0_14, %c0_15] : memref<1x32xf32, #tpu.memory_space<vmem>>, vector<1x32xf32>
    %22 = vector.broadcast %21 : vector<1x32xf32> to vector<8x32xf32>
    %23 = arith.addf %20, %22 : vector<8x32xf32>
    %cst_16 = arith.constant 0.000000e+00 : f32
    %24 = vector.broadcast %cst_16 : f32 to vector<8x32xf32>
    %25 = arith.maximumf %23, %24 : vector<8x32xf32>
    %26 = arith.truncf %25 : vector<8x32xf32> to vector<8x32xbf16>
    %c0_17 = arith.constant 0 : index
    %c0_18 = arith.constant 0 : index
    %27 = vector.load %arg8[%c0_17, %c0_18] : memref<32x8xbf16, #tpu.memory_space<vmem>>, vector<32x8xbf16>
    %cst_19 = arith.constant dense<0.000000e+00> : vector<8x8xf32>
    %28 = tpu.matmul %26, %27, %cst_19 {dimension_numbers = #tpu.dot_dimension_numbers<[1], [0], [0], [1], [0, 0, 1, 1], [], []>} : vector<8x32xbf16>, vector<32x8xbf16>, vector<8x8xf32> -> vector<8x8xf32>
    %c0_20 = arith.constant 0 : index
    %c0_21 = arith.constant 0 : index
    %29 = vector.load %arg9[%c0_20, %c0_21] : memref<1x8xf32, #tpu.memory_space<vmem>>, vector<1x8xf32>
    %30 = vector.broadcast %29 : vector<1x8xf32> to vector<8x8xf32>
    %31 = arith.addf %28, %30 : vector<8x8xf32>
    %cst_22 = arith.constant -3.000000e+01 : f32
    %cst_23 = arith.constant 3.000000e+01 : f32
    %32 = vector.broadcast %cst_22 : f32 to vector<8x8xf32>
    %33 = arith.maximumf %32, %31 : vector<8x8xf32>
    %34 = vector.broadcast %cst_23 : f32 to vector<8x8xf32>
    %35 = arith.minimumf %34, %33 : vector<8x8xf32>
    %cst_24 = arith.constant 0.000000e+00 : f32
    %36 = vector.broadcast %cst_24 : f32 to vector<8x8xf32>
    %37 = arith.subf %36, %35 : vector<8x8xf32>
    %38 = math.exp %37 : vector<8x8xf32>
    %cst_25 = arith.constant 1.000000e+00 : f32
    %39 = vector.broadcast %cst_25 : f32 to vector<8x8xf32>
    %40 = arith.addf %39, %38 : vector<8x8xf32>
    %41 = tpu.reciprocal %40 {approx = true} : vector<8x8xf32> -> vector<8x8xf32>
    %c0_26 = arith.constant 0 : index
    %c0_27 = arith.constant 0 : index
    %42 = vector.load %arg10[%c0_26, %c0_27] : memref<8x8xf32, #tpu.memory_space<vmem>>, vector<8x8xf32>
    tpu.vector_store %arg10[%c0_26, %c0_27], %41 {strides = array<i32>} : memref<8x8xf32, #tpu.memory_space<vmem>>, vector<8x8xf32>,
    return
  }
  func.func @transform_0(%arg0: i32) -> (i32, i32) {
    %c0_i32 = arith.constant 0 : i32
    %c0_i32_0 = arith.constant 0 : i32
    return %arg0, %c0_i32 : i32, i32
  }
  func.func @transform_1(%arg0: i32) -> (i32, i32) {
    %c0_i32 = arith.constant 0 : i32
    %c0_i32_0 = arith.constant 0 : i32
    %c0_i32_1 = arith.constant 0 : i32
    return %c0_i32, %c0_i32_0 : i32, i32
  }
  func.func @transform_2(%arg0: i32) -> (i32, i32) {
    %c0_i32 = arith.constant 0 : i32
    %c0_i32_0 = arith.constant 0 : i32
    %c0_i32_1 = arith.constant 0 : i32
    return %c0_i32, %c0_i32_0 : i32, i32
  }
  func.func @transform_3(%arg0: i32) -> (i32, i32) {
    %c0_i32 = arith.constant 0 : i32
    %c0_i32_0 = arith.constant 0 : i32
    %c0_i32_1 = arith.constant 0 : i32
    return %c0_i32, %c0_i32_0 : i32, i32
  }
  func.func @transform_4(%arg0: i32) -> (i32, i32) {
    %c0_i32 = arith.constant 0 : i32
    %c0_i32_0 = arith.constant 0 : i32
    %c0_i32_1 = arith.constant 0 : i32
    return %c0_i32, %c0_i32_0 : i32, i32
  }
  func.func @transform_5(%arg0: i32) -> (i32, i32) {
    %c0_i32 = arith.constant 0 : i32
    %c0_i32_0 = arith.constant 0 : i32
    %c0_i32_1 = arith.constant 0 : i32
    return %c0_i32, %c0_i32_0 : i32, i32
  }
  func.func @transform_6(%arg0: i32) -> (i32, i32) {
    %c0_i32 = arith.constant 0 : i32
    %c0_i32_0 = arith.constant 0 : i32
    %c0_i32_1 = arith.constant 0 : i32
    return %c0_i32, %c0_i32_0 : i32, i32
  }
  func.func @transform_7(%arg0: i32) -> (i32, i32) {
    %c0_i32 = arith.constant 0 : i32
    %c0_i32_0 = arith.constant 0 : i32
    %c0_i32_1 = arith.constant 0 : i32
    return %c0_i32, %c0_i32_0 : i32, i32
  }
  func.func @transform_8(%arg0: i32) -> (i32, i32) {
    %c0_i32 = arith.constant 0 : i32
    %c0_i32_0 = arith.constant 0 : i32
    %c0_i32_1 = arith.constant 0 : i32
    return %c0_i32, %c0_i32_0 : i32, i32
  }
  func.func @transform_9(%arg0: i32) -> (i32, i32) {
    %c0_i32 = arith.constant 0 : i32
    %c0_i32_0 = arith.constant 0 : i32
    return %arg0, %c0_i32 : i32, i32
  }
}

</mosaic_0001>

<llo_original>
// kernel: tpu_custom_call.1
$region0: #{tpu_custom_call.1}
  #allocation0 [shape = 'u32[]', space=smem, size = 0x4, offset = 0x4, fixed_abs, tag = 'smem constant byte address 0x4 - core index']
  #allocation1 [shape = 'u32[144,128]{1,0:T(1,128)}', space=vmem, size = 0x12000, scoped, tag = 'internal scratch']
  %s0 = inlined_call_operand.vmem [shape: f32[8,1], index: 0, kind: input, shape index: {}]
  %s1 = inlined_call_operand.hbm [shape: f32[1,32], index: 1, kind: input, shape index: {}]
  %s2 = inlined_call_operand.hbm [shape: f32[1,32], index: 2, kind: input, shape index: {}]
  %s3 = inlined_call_operand.vmem [shape: bf16[32,32], index: 3, kind: input, shape index: {}]
  %s4 = inlined_call_operand.hbm [shape: f32[1,32], index: 4, kind: input, shape index: {}]
  %s5 = inlined_call_operand.vmem [shape: bf16[32,32], index: 5, kind: input, shape index: {}]
  %s6 = inlined_call_operand.vmem [shape: f32[1,32], index: 6, kind: input, shape index: {}]
  %s7 = inlined_call_operand.vmem [shape: bf16[32,8], index: 7, kind: input, shape index: {}]
  %s8 = inlined_call_operand.vmem [shape: f32[1,8], index: 8, kind: input, shape index: {}]
  %s9 = inlined_call_operand.hbm [shape: f32[8,8], index: 9, kind: output, shape index: {}]
  %s10 = sld [smem:[#allocation0]]
  $region58: #{tpu_custom_call.1} parent=0
    _
  %s12 = ssub.s32 1, %s10
  %s13 = scalar_select 0, %s12, %s10
  $region1: #{tpu_custom_call.1} parent=0
    #allocation2 [shape = 'u8[512]{0}', space=vmem, size = 0x400, scoped, tag = 'input window, operand 1, single buffered']
    #allocation3 [shape = 's32[1]{0}', space=sflag, size = 0x4, scoped, tag = 'scoped memory for tpu_custom_call.1']
    #allocation4 [shape = 's32[1]{0}', space=sflag, size = 0x4, scoped, tag = 'scoped memory for tpu_custom_call.1']
    #allocation5 [shape = 'u8[512]{0}', space=vmem, size = 0x400, scoped, tag = 'input window, operand 2, single buffered']
    #allocation6 [shape = 's32[1]{0}', space=sflag, size = 0x4, scoped, tag = 'scoped memory for tpu_custom_call.1']
    #allocation7 [shape = 'u8[512]{0}', space=vmem, size = 0x400, scoped, tag = 'input window, operand 4, single buffered']
    #allocation8 [shape = 'u8[4096]{0}', space=vmem, size = 0x1000, scoped, tag = 'output window, operand 0, single buffered']
    %14 = vsyncpa [#allocation3], 0
    %15 = vsyncpa [#allocation6], 0
    %16 = vsyncpa [#allocation4], 0
    // Predicated region
    $region2: #{tpu_custom_call.1} parent=1 // pred_check
      _
    $region3: #{tpu_custom_call.1} parent=1 // pred_check_branch
      %18 = sbr.rel (0) target = $region5
    $region4: #{tpu_custom_call.1} parent=1 // pred_region
      _
    $region5: #{tpu_custom_call.1} parent=1 // pred_fallthru
      _
    // Predicated region
    $region6: #{tpu_custom_call.1} parent=1 // pred_check
      _
    $region7: #{tpu_custom_call.1} parent=1 // pred_check_branch
      %20 = sbr.rel (0) target = $region9
    $region8: #{tpu_custom_call.1} parent=1 // pred_region
      %s22 = ssub.s32 16, 16
      %23 = vsyncadd [#allocation3], %s22
      %s25 = sshll.u32 [#allocation2], 4
      %s26 = int_to_ptr.vmem [resolvable:$true] %s25
      %28 = dma.hbm_to_vmem [thread:$0]  %s1, 16, %s26, [#allocation3]
    $region9: #{tpu_custom_call.1} parent=1 // pred_fallthru
      _
    // Predicated region
    $region10: #{tpu_custom_call.1} parent=1 // pred_check
      _
    $region11: #{tpu_custom_call.1} parent=1 // pred_check_branch
      %30 = sbr.rel (0) target = $region13
    $region12: #{tpu_custom_call.1} parent=1 // pred_region
      %s32 = ssub.s32 16, 16
      %33 = vsyncadd [#allocation6], %s32
      %s35 = sshll.u32 [#allocation5], 4
      %s36 = int_to_ptr.vmem [resolvable:$true] %s35
      %38 = dma.hbm_to_vmem [thread:$0]  %s2, 16, %s36, [#allocation6]
    $region13: #{tpu_custom_call.1} parent=1 // pred_fallthru
      _
    // Predicated region
    $region14: #{tpu_custom_call.1} parent=1 // pred_check
      _
    $region15: #{tpu_custom_call.1} parent=1 // pred_check_branch
      %40 = sbr.rel (0) target = $region17
    $region16: #{tpu_custom_call.1} parent=1 // pred_region
      _
    $region17: #{tpu_custom_call.1} parent=1 // pred_fallthru
      _
    // Predicated region
    $region18: #{tpu_custom_call.1} parent=1 // pred_check
      _
    $region19: #{tpu_custom_call.1} parent=1 // pred_check_branch
      %42 = sbr.rel (0) target = $region21
    $region20: #{tpu_custom_call.1} parent=1 // pred_region
      %s44 = ssub.s32 16, 16
      %45 = vsyncadd [#allocation6], %s44
      %s47 = sshll.u32 [#allocation7], 4
      %s48 = int_to_ptr.vmem [resolvable:$true] %s47
      %50 = dma.hbm_to_vmem [thread:$0]  %s4, 16, %s48, [#allocation6]
    $region21: #{tpu_custom_call.1} parent=1 // pred_fallthru
      _
    // Predicated region
    $region22: #{tpu_custom_call.1} parent=1 // pred_check
      _
    $region23: #{tpu_custom_call.1} parent=1 // pred_check_branch
      %52 = sbr.rel (0) target = $region25
    $region24: #{tpu_custom_call.1} parent=1 // pred_region
      _
    $region25: #{tpu_custom_call.1} parent=1 // pred_fallthru
      _
    // Predicated region
    $region26: #{tpu_custom_call.1} parent=1 // pred_check
      _
    $region27: #{tpu_custom_call.1} parent=1 // pred_check_branch
      %54 = sbr.rel (0) target = $region29
    $region28: #{tpu_custom_call.1} parent=1 // pred_region
      _
    $region29: #{tpu_custom_call.1} parent=1 // pred_fallthru
      _
    // Predicated region
    $region30: #{tpu_custom_call.1} parent=1 // pred_check
      _
    $region31: #{tpu_custom_call.1} parent=1 // pred_check_branch
      %56 = sbr.rel (0) target = $region33
    $region32: #{tpu_custom_call.1} parent=1 // pred_region
      _
    $region33: #{tpu_custom_call.1} parent=1 // pred_fallthru
      _
    // Predicated region
    $region34: #{tpu_custom_call.1} parent=1 // pred_check
      _
    $region35: #{tpu_custom_call.1} parent=1 // pred_check_branch
      %58 = sbr.rel (0) target = $region37
    $region36: #{tpu_custom_call.1} parent=1 // pred_region
      _
    $region37: #{tpu_custom_call.1} parent=1 // pred_fallthru
      _
    // Predicated region
    $region38: #{tpu_custom_call.1} parent=1 // pred_check
      _
    $region39: #{tpu_custom_call.1} parent=1 // pred_check_branch
      %60 = sbr.rel (0) target = $region41
    $region40: #{tpu_custom_call.1} parent=1 // pred_region
      %61 = dma.done [#allocation3], 16
    $region41: #{tpu_custom_call.1} parent=1 // pred_fallthru
      _
    // Predicated region
    $region42: #{tpu_custom_call.1} parent=1 // pred_check
      _
    $region43: #{tpu_custom_call.1} parent=1 // pred_check_branch
      %63 = sbr.rel (0) target = $region45
    $region44: #{tpu_custom_call.1} parent=1 // pred_region
      %64 = dma.done [#allocation6], 16
    $region45: #{tpu_custom_call.1} parent=1 // pred_fallthru
      _
    // Predicated region
    $region46: #{tpu_custom_call.1} parent=1 // pred_check
      _
    $region47: #{tpu_custom_call.1} parent=1 // pred_check_branch
      %66 = sbr.rel (0) target = $region49
    $region48: #{tpu_custom_call.1} parent=1 // pred_region
      %67 = dma.done [#allocation6], 16
    $region49: #{tpu_custom_call.1} parent=1 // pred_fallthru
      _
    %v69 = vld [vmem:[%s0] sm:$0xff]
    %v70 = vld [vmem:[#allocation2] sm:$0x1]
    %72 = vset.pattern.permute.xlu0 0
    %73 = vperm.xlu0 %72, %v69
    %v74 = vpop.permute.xlu0 %73
    %v77 = vlaneseq
    %v78 = vshrl.u32 %v77, 7
    %v79 = vsub.s32 0, %v78
    %v80 = vrot.slane %v70, %v79
    %v82 = vmul.f32 %v74, %v80
    %v83 = vld [vmem:[#allocation5] sm:$0x1]
    %v85 = vlaneseq
    %v86 = vshrl.u32 %v85, 7
    %v87 = vsub.s32 0, %v86
    %v88 = vrot.slane %v83, %v87
    %v90 = vadd.f32 %v82, %v88
    %v91 = vmax.f32 %v90, 0.0
    %v92 = vpack.c.bf16 %v91, %v91
    %v93 = vld [vmem:[%s3] sm:$0xf]
    %v94 = vld [vmem:[%s3 + $0x4] sm:$0xf]
    %v95 = vld [vmem:[%s3 + $0x8] sm:$0xf]
    %v96 = vld [vmem:[%s3 + $0xc] sm:$0xf]
    %v97 = vld [vmem:[#allocation7] sm:$0x1]
    %v99 = vlaneseq
    %v100 = vshrl.u32 %v99, 7
    %v101 = vsub.s32 0, %v100
    %v102 = vrot.slane %v97, %v101
    %v108 = vunpack.c.l.b16 %v93
    %v109 = vunpack.c.l.b16 %v94
    %v110 = vunpack.c.l.b16 %v95
    %v111 = vunpack.c.l.b16 %v96
    %v112 = vpack.c.b16 %v109, %v108
    %v113 = vpack.c.b16 %v111, %v110
    %vm116 = vcmask 261120
    %v118 = vsel %vm116, %v92, 0
    %120 = vmatprep.subr.bf16.mxu0 0
    %121 = vmatpush1.bf16.msra.mxu0 0
    %122 = vmatprep.subr.bf16.mxu0 0
    %123 = vmatpush1.bf16.msra.mxu0 0
    %124 = vmatprep.subr.bf16.mxu0 0
    %125 = vmatpush1.bf16.msra.mxu0 0
    %126 = vmatprep.subr.bf16.mxu0 0
    %127 = vmatpush1.bf16.msra.mxu0 0
    %128 = vmatprep.subr.bf16.mxu0 0
    %129 = vmatpush1.bf16.msra.mxu0 0
    %130 = vmatprep.subr.bf16.mxu0 0
    %131 = vmatpush1.bf16.msra.mxu0 0
    %132 = vmatprep.subr.bf16.mxu0 0
    %133 = vmatpush1.bf16.msra.mxu0 %v113
    %134 = vmatprep.subr.bf16.mxu0 0
    %135 = vmatpush1.bf16.msra.mxu0 %v112
    %136 = vmatprep.subr.bf16.mxu0 0
    %137 = vmatpush2.bf16.msra.mxu0 0
    %138 = vmatprep.subr.bf16.mxu0 0
    %139 = vmatpush2.bf16.msra.mxu0 0
    %140 = vmatprep.subr.bf16.mxu0 0
    %141 = vmatpush2.bf16.msra.mxu0 0
    %142 = vmatprep.subr.bf16.mxu0 0
    %143 = vmatpush2.bf16.msra.mxu0 0
    %144 = vmatprep.subr.bf16.mxu0 0
    %145 = vmatpush2.bf16.msra.mxu0 0
    %146 = vmatprep.subr.bf16.mxu0 0
    %147 = vmatpush2.bf16.msra.mxu0 0
    %148 = vmatprep.subr.bf16.mxu0 0
    %149 = vmatpush2.bf16.msra.mxu0 0
    %150 = vmatprep.subr.bf16.mxu0 0
    %151 = vmatpush2.bf16.msra.mxu0 0
    %152 = vmatprep.mubr.bf16.mxu0 0
    %153 = vmatmul.mubr.bf16.gmra.mxu0 %v118
    %v154 = vpop.f32.mrf.mxu0
    %v155 = vadd.f32 %v102, %v154
    %v156 = vpop.f32.mrf.mxu0
    %v157 = vpop.f32.mrf.mxu0
    %v158 = vpop.f32.mrf.mxu0
    %159 = vdwg.mxu0
    %v160 = vmax.f32 %v155, 0.0
    %v161 = vpack.c.bf16 %v160, %v160
    %v162 = vld [vmem:[%s5] sm:$0xf]
    %v163 = vld [vmem:[%s5 + $0x4] sm:$0xf]
    %v164 = vld [vmem:[%s5 + $0x8] sm:$0xf]
    %v165 = vld [vmem:[%s5 + $0xc] sm:$0xf]
    %v166 = vld [vmem:[%s6] sm:$0x1]
    %v168 = vlaneseq
    %v169 = vshrl.u32 %v168, 7
    %v170 = vsub.s32 0, %v169
    %v171 = vrot.slane %v166, %v170
    %v177 = vunpack.c.l.b16 %v162
    %v178 = vunpack.c.l.b16 %v163
    %v179 = vunpack.c.l.b16 %v164
    %v180 = vunpack.c.l.b16 %v165
    %v181 = vpack.c.b16 %v178, %v177
    %v182 = vpack.c.b16 %v180, %v179
    %v186 = vsel %vm116, %v161, 0
    %188 = vmatprep.subr.bf16.mxu0 0
    %189 = vmatpush1.bf16.msra.mxu0 0
    %190 = vmatprep.subr.bf16.mxu0 0
    %191 = vmatpush1.bf16.msra.mxu0 0
    %192 = vmatprep.subr.bf16.mxu0 0
    %193 = vmatpush1.bf16.msra.mxu0 0
    %194 = vmatprep.subr.bf16.mxu0 0
    %195 = vmatpush1.bf16.msra.mxu0 0
    %196 = vmatprep.subr.bf16.mxu0 0
    %197 = vmatpush1.bf16.msra.mxu0 0
    %198 = vmatprep.subr.bf16.mxu0 0
    %199 = vmatpush1.bf16.msra.mxu0 0
    %200 = vmatprep.subr.bf16.mxu0 0
    %201 = vmatpush1.bf16.msra.mxu0 %v182
    %202 = vmatprep.subr.bf16.mxu0 0
    %203 = vmatpush1.bf16.msra.mxu0 %v181
    %204 = vmatprep.subr.bf16.mxu0 0
    %205 = vmatpush2.bf16.msra.mxu0 0
    %206 = vmatprep.subr.bf16.mxu0 0
    %207 = vmatpush2.bf16.msra.mxu0 0
    %208 = vmatprep.subr.bf16.mxu0 0
    %209 = vmatpush2.bf16.msra.mxu0 0
    %210 = vmatprep.subr.bf16.mxu0 0
    %211 = vmatpush2.bf16.msra.mxu0 0
    %212 = vmatprep.subr.bf16.mxu0 0
    %213 = vmatpush2.bf16.msra.mxu0 0
    %214 = vmatprep.subr.bf16.mxu0 0
    %215 = vmatpush2.bf16.msra.mxu0 0
    %216 = vmatprep.subr.bf16.mxu0 0
    %217 = vmatpush2.bf16.msra.mxu0 0
    %218 = vmatprep.subr.bf16.mxu0 0
    %219 = vmatpush2.bf16.msra.mxu0 0
    %220 = vmatprep.mubr.bf16.mxu0 0
    %221 = vmatmul.mubr.bf16.gmra.mxu0 %v186
    %v222 = vpop.f32.mrf.mxu0
    %v223 = vadd.f32 %v171, %v222
    %v224 = vpop.f32.mrf.mxu0
    %v225 = vpop.f32.mrf.mxu0
    %v226 = vpop.f32.mrf.mxu0
    %227 = vdwg.mxu0
    %v228 = vmax.f32 %v223, 0.0
    %v229 = vpack.c.bf16 %v228, %v228
    %v230 = vld [vmem:[%s7] sm:$0xf]
    %v231 = vld [vmem:[%s7 + $0x4] sm:$0xf]
    %v232 = vld [vmem:[%s7 + $0x8] sm:$0xf]
    %v233 = vld [vmem:[%s7 + $0xc] sm:$0xf]
    %v234 = vld [vmem:[%s8] sm:$0x1]
    %v236 = vlaneseq
    %v237 = vshrl.u32 %v236, 7
    %v238 = vsub.s32 0, %v237
    %v239 = vrot.slane %v234, %v238
    %v245 = vunpack.c.l.b16 %v230
    %v246 = vunpack.c.l.b16 %v231
    %v247 = vunpack.c.l.b16 %v232
    %v248 = vunpack.c.l.b16 %v233
    %v249 = vpack.c.b16 %v246, %v245
    %v250 = vpack.c.b16 %v248, %v247
    %v254 = vsel %vm116, %v229, 0
    %256 = vmatprep.subr.bf16.mxu0 0
    %257 = vmatpush1.bf16.msra.mxu0 0
    %258 = vmatprep.subr.bf16.mxu0 0
    %259 = vmatpush1.bf16.msra.mxu0 0
    %260 = vmatprep.subr.bf16.mxu0 0
    %261 = vmatpush1.bf16.msra.mxu0 0
    %262 = vmatprep.subr.bf16.mxu0 0
    %263 = vmatpush1.bf16.msra.mxu0 0
    %264 = vmatprep.subr.bf16.mxu0 0
    %265 = vmatpush1.bf16.msra.mxu0 0
    %266 = vmatprep.subr.bf16.mxu0 0
    %267 = vmatpush1.bf16.msra.mxu0 0
    %268 = vmatprep.subr.bf16.mxu0 0
    %269 = vmatpush1.bf16.msra.mxu0 %v250
    %270 = vmatprep.subr.bf16.mxu0 0
    %271 = vmatpush1.bf16.msra.mxu0 %v249
    %272 = vmatprep.subr.bf16.mxu0 0
    %273 = vmatpush2.bf16.msra.mxu0 0
    %274 = vmatprep.subr.bf16.mxu0 0
    %275 = vmatpush2.bf16.msra.mxu0 0
    %276 = vmatprep.subr.bf16.mxu0 0
    %277 = vmatpush2.bf16.msra.mxu0 0
    %278 = vmatprep.subr.bf16.mxu0 0
    %279 = vmatpush2.bf16.msra.mxu0 0
    %280 = vmatprep.subr.bf16.mxu0 0
    %281 = vmatpush2.bf16.msra.mxu0 0
    %282 = vmatprep.subr.bf16.mxu0 0
    %283 = vmatpush2.bf16.msra.mxu0 0
    %284 = vmatprep.subr.bf16.mxu0 0
    %285 = vmatpush2.bf16.msra.mxu0 0
    %286 = vmatprep.subr.bf16.mxu0 0
    %287 = vmatpush2.bf16.msra.mxu0 0
    %288 = vmatprep.mubr.bf16.mxu0 0
    %289 = vmatmul.mubr.bf16.gmra.mxu0 %v254
    %v290 = vpop.f32.mrf.mxu0
    %v291 = vadd.f32 %v239, %v290
    %v292 = vpop.f32.mrf.mxu0
    %v293 = vpop.f32.mrf.mxu0
    %v294 = vpop.f32.mrf.mxu0
    %295 = vdwg.mxu0
    %v296 = vmax.f32 %v291, -30.0
    %v297 = vmin.f32 %v296, 30.0
    %v298 = vsub.f32 0.0, %v297
    %v299 = vmul.f32 %v298, 1.442695
    %v300 = vpow.pop %v299
    %v301 = vadd.f32 %v300, 1.0
    %v302 = vrcp.pop %v301
    %vm303 = vcmask 64512
    %304 = vst.msk [vmem:[#allocation8] sm:$0xff] %vm303, %v302
    // Predicated region
    $region50: #{tpu_custom_call.1} parent=1 // pred_check
      _
    $region51: #{tpu_custom_call.1} parent=1 // pred_check_branch
      %306 = sbr.rel (0) target = $region53
    $region52: #{tpu_custom_call.1} parent=1 // pred_region
      %s308 = ssub.s32 128, 128
      %309 = vsyncadd [#allocation4], %s308
      %s311 = sshll.u32 [#allocation8], 4
      %s312 = int_to_ptr.vmem [resolvable:$true] %s311
      %314 = dma.vmem_to_hbm [thread:$0]  %s312, 128, %s9, [#allocation4]
    $region53: #{tpu_custom_call.1} parent=1 // pred_fallthru
      _
    // Predicated region
    $region54: #{tpu_custom_call.1} parent=1 // pred_check
      _
    $region55: #{tpu_custom_call.1} parent=1 // pred_check_branch
      %316 = sbr.rel (0) target = $region57
    $region56: #{tpu_custom_call.1} parent=1 // pred_region
      %317 = dma.done [#allocation4], 128
    $region57: #{tpu_custom_call.1} parent=1 // pred_fallthru
      _
    %318 = vsyncpa [#allocation3], 1
    %319 = vsyncpa [#allocation6], 1
    %320 = vsyncpa [#allocation4], 1

</llo_original>
